<compile_context>
chip_gen: v7x
topology: tpu7x:2x2x1
jax: 0.10.0
libtpu: 0.0.40
codegen_flags: <defaults>
</compile_context>

<pallas_src>
import functools

import jax
import jax.numpy as jnp
from jax.experimental import pallas as pl
from jax.experimental.pallas import tpu as pltpu

ALPHA = 0.25
GAMMA = 2.0                  # gamma == 2 -> squared in the kernel
BETA = 1.0 / 9.0
HALF_BETA = 0.5 * BETA
INV_2BETA = 0.5 / BETA

LANES = 128
ANCHOR_ALIGN = 2048          # TN must be a multiple of this (lane-dense + bf16 safe)
MAX_TN = 8192
NCORES = 2                   # leading 'parallel' grid axis (v7x megacore split)
VMEM_LIMIT = 32 * 1024 * 1024
INPUT_VMEM_BUDGET = 8 * 1024 * 1024


# ----------------------------------------------------------------------------
# Target maker (plain JAX glue: IoU matching, argmax gathers, box encoding)
# ----------------------------------------------------------------------------
def cxcy_to_xy(cxcy):
    return jnp.concatenate(
        [cxcy[..., :2] - cxcy[..., 2:] / 2.0, cxcy[..., :2] + cxcy[..., 2:] / 2.0],
        axis=-1)


def xy_to_cxcy(xy):
    return jnp.concatenate(
        [(xy[..., :2] + xy[..., 2:]) / 2.0, xy[..., 2:] - xy[..., :2]], axis=-1)


def find_jaccard_overlap(set1, set2):
    # set1: (P, 4) xyxy, set2: (M, 4) xyxy -> (P, M)
    lt = jnp.maximum(set1[:, None, :2], set2[None, :, :2])
    rb = jnp.minimum(set1[:, None, 2:], set2[None, :, 2:])
    wh = jnp.clip(rb - lt, 0.0)
    inter = wh[..., 0] * wh[..., 1]
    area1 = (set1[:, 2] - set1[:, 0]) * (set1[:, 3] - set1[:, 1])
    area2 = (set2[:, 2] - set2[:, 0]) * (set2[:, 3] - set2[:, 1])
    union = area1[:, None] + area2[None, :] - inter
    # guard against 0/0 for degenerate (zero-area) padded GT boxes
    return inter / jnp.maximum(union, 1e-10)


def encode(cxcy, center_anchor):
    # standard RetinaNet/SSD encoding (no variances)
    return jnp.concatenate(
        [(cxcy[..., :2] - center_anchor[..., :2]) / center_anchor[..., 2:],
         jnp.log(cxcy[..., 2:] / center_anchor[..., 2:])], axis=-1)


def make_targets_single(boxes, labels, center_anchor, corner_anchor, num_classes):
    """boxes: (M, 4) xyxy, labels: (M,) int.  Returns per-image targets."""
    P = center_anchor.shape[0]
    iou = find_jaccard_overlap(corner_anchor, boxes)          # (P, M)
    iou_max = iou.max(axis=1)
    iou_argmax = iou.argmax(axis=1)

    negative = iou_max < 0.4
    pos_thresh = iou_max >= 0.5
    # fallback: if no anchor crosses the threshold, take best anchor per object
    iou_argmax_per_obj = iou.argmax(axis=0)                   # (M,)
    fallback = jnp.zeros((P,), jnp.bool_).at[iou_argmax_per_obj].set(True)
    positive = jnp.where(jnp.any(pos_thresh), pos_thresh, fallback)

    argmax_labels = labels[iou_argmax] + 1                    # (P,)
    onehot = jax.nn.one_hot(argmax_labels, num_classes, dtype=jnp.float32)

    gt_classes = -jnp.ones((P, num_classes), jnp.float32)
    gt_classes = jnp.where(negative[:, None], 0.0, gt_classes)
    gt_classes = jnp.where(positive[:, None], onehot, gt_classes)

    anchor_id = -jnp.ones((P,), jnp.float32)
    anchor_id = jnp.where(negative, 0.0, anchor_id)
    anchor_id = jnp.where(positive, 1.0, anchor_id)

    argmax_locations = boxes[iou_argmax]                      # (P, 4)
    gt_locations = encode(xy_to_cxcy(argmax_locations), center_anchor)
    return gt_classes, gt_locations, anchor_id


def target_maker(gt_boxes, gt_labels, center_anchor, num_classes):
    corner_anchor = cxcy_to_xy(center_anchor)
    fn = functools.partial(make_targets_single,
                           center_anchor=center_anchor,
                           corner_anchor=corner_anchor,
                           num_classes=num_classes)
    return jax.vmap(fn)(gt_boxes, gt_labels)


# ----------------------------------------------------------------------------
# Pallas kernel: masked focal loss + masked smooth-L1 + num_pos partial sums
# ----------------------------------------------------------------------------
def retina_loss_kernel(pc_ref, gc_ref, pd_ref, gd_ref, lm_ref,
                       cls_acc_ref, loc_acc_ref, npos_acc_ref):
    # Output blocks are indexed only by the parallel axis -> they stay resident
    # in VMEM across the whole inner ("arbitrary") loop and act as accumulators.
    @pl.when(pl.program_id(1) == 0)
    def _():
        cls_acc_ref[...] = jnp.zeros_like(cls_acc_ref)
        loc_acc_ref[...] = jnp.zeros_like(loc_acc_ref)
        npos_acc_ref[...] = jnp.zeros_like(npos_acc_ref)

    # ---- focal loss (FocalLoss.forward), lane-dense (rows, 128) ----
    pc = pc_ref[...].astype(jnp.float32)
    gc = gc_ref[...].astype(jnp.float32)          # values in {-1, 0, 1}
    is_pos = gc == 1.0
    p_t = jnp.where(is_pos, pc, 1.0 - pc)
    a_t = jnp.where(is_pos, ALPHA, 1.0 - ALPHA)
    one_m_pt = 1.0 - p_t
    # single-log BCE: valid because gt_cls is one-hot wherever the mask is
    # nonzero; gc == -1 rows are zero-masked BEFORE the reduction below.
    bce = -jnp.maximum(jnp.log(p_t), -100.0)
    cls_mask = (gc != -1.0).astype(jnp.float32)   # == (depth >= 0)
    focal = (a_t * cls_mask) * (one_m_pt * one_m_pt) * bce
    # sublane-group add into the (8,128) accumulator: pure VPU, no XLU tree
    cls_part = focal.reshape(-1, 8, LANES).sum(axis=0)
    cls_acc_ref[0, :, :] = cls_acc_ref[0, :, :] + cls_part

    # ---- smooth L1 (SmoothL1Loss.forward) ----
    pd = pd_ref[...].astype(jnp.float32)
    gd = gd_ref[...].astype(jnp.float32)
    lm = lm_ref[...].astype(jnp.float32)          # (depth > 0), expanded x4
    x = jnp.abs(pd - gd)
    sl1 = jnp.where(x >= BETA, x - HALF_BETA, INV_2BETA * (x * x))
    loc_part = (sl1 * lm).reshape(-1, 8, LANES).sum(axis=0)
    loc_acc_ref[0, :, :] = loc_acc_ref[0, :, :] + loc_part

    npos_part = lm.reshape(-1, 8, LANES).sum(axis=0)
    npos_acc_ref[0, :, :] = npos_acc_ref[0, :, :] + npos_part


def _pick_anchor_tile(N, C):
    """Anchors per grid step: multiple of ANCHOR_ALIGN, sized to a VMEM budget."""
    # per-anchor bytes streamed per step: pc f32 + gc bf16 + pd/gd f32 + lm bf16
    bytes_per_anchor = C * (4 + 2) + 4 * (4 + 4 + 2)
    max_tn = INPUT_VMEM_BUDGET // (2 * bytes_per_anchor)   # x2: double buffering
    tn = min(MAX_TN, (max_tn // ANCHOR_ALIGN) * ANCHOR_ALIGN)
    tn = max(tn, ANCHOR_ALIGN)
    # do not tile wider than each core's (padded) share of the work
    per_core = -(-N // NCORES)
    per_core = -(-per_core // ANCHOR_ALIGN) * ANCHOR_ALIGN
    return min(tn, per_core)


def retina_loss_pallas(pred_cls, pred_loc, gt_cls, gt_locs, depth):
    B, P, C = pred_cls.shape
    N = B * P

    TN = _pick_anchor_tile(N, C)
    Npad = -(-N // (NCORES * TN)) * (NCORES * TN)
    G = Npad // (NCORES * TN)
    pad = Npad - N

    pc = pred_cls.reshape(N, C)
    gc = gt_cls.reshape(N, C).astype(jnp.bfloat16)          # {-1,0,1} exact in bf16
    pd = pred_loc.reshape(N, 4)
    gd = gt_locs.reshape(N, 4)
    lm = jnp.broadcast_to(
        (depth.reshape(N) > 0).astype(jnp.bfloat16)[:, None], (N, 4))

    if pad:
        # padded anchors: gt_cls = -1 (cls-masked), loc mask = 0 -> zero contribution
        pc = jnp.pad(pc, ((0, pad), (0, 0)), constant_values=0.5)
        gc = jnp.pad(gc, ((0, pad), (0, 0)), constant_values=-1.0)
        pd = jnp.pad(pd, ((0, pad), (0, 0)))
        gd = jnp.pad(gd, ((0, pad), (0, 0)))
        lm = jnp.pad(lm, ((0, pad), (0, 0)))

    # lane-dense views: fold the class / coord axis into the 128-lane dimension
    pc = pc.reshape(Npad * C // LANES, LANES)
    gc = gc.reshape(Npad * C // LANES, LANES)
    pd = pd.reshape(Npad * 4 // LANES, LANES)
    gd = gd.reshape(Npad * 4 // LANES, LANES)
    lm = lm.reshape(Npad * 4 // LANES, LANES)

    rc_blk = TN * C // LANES          # cls rows per grid step (multiple of 16)
    rl_blk = TN * 4 // LANES          # loc rows per grid step (multiple of 16)

    def row_map(c, j):                # block-row index for anchors [ (cG+j)TN , ... )
        return (c * G + j, 0)

    grid_spec = pltpu.PrefetchScalarGridSpec(
        num_scalar_prefetch=0,
        grid=(NCORES, G),
        in_specs=[
            pl.BlockSpec((rc_blk, LANES), row_map),   # pred_cls
            pl.BlockSpec((rc_blk, LANES), row_map),   # gt_cls (bf16)
            pl.BlockSpec((rl_blk, LANES), row_map),   # pred_loc
            pl.BlockSpec((rl_blk, LANES), row_map),   # gt_loc
            pl.BlockSpec((rl_blk, LANES), row_map),   # loc mask (bf16)
        ],
        out_specs=[
            pl.BlockSpec((1, 8, LANES), lambda c, j: (c, 0, 0)),
            pl.BlockSpec((1, 8, LANES), lambda c, j: (c, 0, 0)),
            pl.BlockSpec((1, 8, LANES), lambda c, j: (c, 0, 0)),
        ],
    )

    cls_part, loc_part, npos_part = pl.pallas_call(
        retina_loss_kernel,
        out_shape=(
            jax.ShapeDtypeStruct((NCORES, 8, LANES), jnp.float32),
            jax.ShapeDtypeStruct((NCORES, 8, LANES), jnp.float32),
            jax.ShapeDtypeStruct((NCORES, 8, LANES), jnp.float32),
        ),
        grid_spec=grid_spec,
        compiler_params=pltpu.CompilerParams(
            dimension_semantics=("parallel", "arbitrary"),
            vmem_limit_bytes=VMEM_LIMIT),
    )(pc, gc, pd, gd, lm)

    cls_sum = jnp.sum(cls_part)
    loc_sum = jnp.sum(loc_part)
    npos = jnp.sum(npos_part) / 4.0          # loc mask was expanded x4 per anchor
    # Guard against the degenerate zero-positive batch (the original divides
    # unguarded and would produce inf/NaN); identical whenever >=1 positive exists.
    num_of_pos = jnp.maximum(npos, 1.0)
    cls_loss = cls_sum / num_of_pos
    loc_loss = loc_sum / num_of_pos
    return cls_loss + loc_loss, (cls_loss, loc_loss)


# ----------------------------------------------------------------------------
# RetinaLoss.forward
# ----------------------------------------------------------------------------
def retina_loss(pred, gt_boxes, gt_labels, center_anchor, num_classes):
    pred_cls, pred_loc = pred
    n_priors = center_anchor.shape[0]
    assert n_priors == pred_loc.shape[1] == pred_cls.shape[1]
    gt_cls, gt_locs, depth = target_maker(gt_boxes, gt_labels, center_anchor,
                                          num_classes)
    return retina_loss_pallas(pred_cls, pred_loc, gt_cls, gt_locs, depth)


# ----------------------------------------------------------------------------
# Pure-JAX reference of the losses (for a sanity check)
# ----------------------------------------------------------------------------
def retina_loss_ref(pred_cls, pred_loc, gt_cls, gt_locs, depth):
    a_t = jnp.where(gt_cls == 1.0, ALPHA, 1.0 - ALPHA)
    p_t = jnp.where(gt_cls == 1.0, pred_cls, 1.0 - pred_cls)
    bce = -(gt_cls * jnp.maximum(jnp.log(pred_cls), -100.0)
            + (1.0 - gt_cls) * jnp.maximum(jnp.log(1.0 - pred_cls), -100.0))
    cls_l = a_t * (1.0 - p_t) ** 2 * bce
    x = jnp.abs(pred_loc - gt_locs)
    loc_l = jnp.where(x >= BETA, x - 0.5 * BETA, 0.5 * x * x / BETA)
    num_pos = jnp.maximum((depth > 0).sum().astype(jnp.float32), 1.0)
    cls_mask = (depth >= 0)[..., None].astype(jnp.float32)
    loc_mask = (depth > 0)[..., None].astype(jnp.float32)
    cls_loss = (cls_l * cls_mask).sum() / num_pos
    loc_loss = (loc_l * loc_mask).sum() / num_pos
    return cls_loss + loc_loss, (cls_loss, loc_loss)


if __name__ == "__main__":
    key = jax.random.PRNGKey(0)
    B, P, C, M = 2, 64, 8, 3            # batch, priors, num_classes, gt boxes/img

    k1, k2, k3, k4, k5 = jax.random.split(key, 5)

    # predictions: class probabilities (post-sigmoid) and box regressions
    pred_cls = jax.nn.sigmoid(jax.random.normal(k1, (B, P, C), jnp.float32))
    pred_loc = 0.1 * jax.random.normal(k2, (B, P, 4), jnp.float32)

    # ground-truth boxes (xyxy in [0,1]) and labels in [0, C-2]
    xy1 = jax.random.uniform(k3, (B, M, 2), minval=0.05, maxval=0.55)
    wh = jax.random.uniform(k4, (B, M, 2), minval=0.15, maxval=0.35)
    gt_boxes = jnp.concatenate([xy1, jnp.clip(xy1 + wh, 0.0, 1.0)], axis=-1)
    gt_labels = jax.random.randint(k5, (B, M), 0, C - 1)

    # anchors: 8x8 grid of 0.25x0.25 boxes (cx, cy, w, h)
    g = (jnp.arange(8, dtype=jnp.float32) + 0.5) / 8.0
    cy, cx = jnp.meshgrid(g, g, indexing="ij")
    center_anchor = jnp.stack(
        [cx.reshape(-1), cy.reshape(-1),
         jnp.full((P,), 0.25), jnp.full((P,), 0.25)], axis=-1)

    total, (cls_loss, loc_loss) = retina_loss(
        (pred_cls, pred_loc), gt_boxes, gt_labels, center_anchor, num_classes=C)
    total = jax.block_until_ready(total)

    # sanity check against pure-JAX reference
    gt_cls, gt_locs, depth = target_maker(gt_boxes, gt_labels, center_anchor, C)
    total_ref, (cls_ref, loc_ref) = retina_loss_ref(
        pred_cls, pred_loc, gt_cls, gt_locs, depth)
    assert jnp.allclose(total, total_ref, rtol=1e-3, atol=1e-3), (total, total_ref)
    assert jnp.allclose(cls_loss, cls_ref, rtol=1e-3, atol=1e-3)
    assert jnp.allclose(loc_loss, loc_ref, rtol=1e-3, atol=1e-3)

    print("KERNEL_OK")
</pallas_src>

<mosaic_0001>
module attributes {stable_mosaic.version = 11 : i64} {
  func.func @retina_loss_kernel(%arg0: i32, %arg1: i32, %arg2: memref<128x128xf32, #tpu.memory_space<vmem>>, %arg3: memref<128x128xbf16, #tpu.memory_space<vmem>>, %arg4: memref<64x128xf32, #tpu.memory_space<vmem>>, %arg5: memref<64x128xf32, #tpu.memory_space<vmem>>, %arg6: memref<64x128xbf16, #tpu.memory_space<vmem>>, %arg7: memref<1x8x128xf32, #tpu.memory_space<vmem>>, %arg8: memref<1x8x128xf32, #tpu.memory_space<vmem>>, %arg9: memref<1x8x128xf32, #tpu.memory_space<vmem>>) attributes {dimension_semantics = [#tpu.dimension_semantics<parallel>, #tpu.dimension_semantics<arbitrary>], iteration_bounds = array<i64: 2, 1>, scalar_prefetch = 0 : i64, scratch_operands = 0 : i64, tpu.core_type = #tpu.core_type<tc>, window_params = [{transform_indices = @transform_0, window_bounds = array<i64: 128, 128>}, {transform_indices = @transform_1, window_bounds = array<i64: 128, 128>}, {transform_indices = @transform_2, window_bounds = array<i64: 64, 128>}, {transform_indices = @transform_3, window_bounds = array<i64: 64, 128>}, {transform_indices = @transform_4, window_bounds = array<i64: 64, 128>}, {transform_indices = @transform_5, window_bounds = array<i64: 1, 8, 128>}, {transform_indices = @transform_6, window_bounds = array<i64: 1, 8, 128>}, {transform_indices = @transform_7, window_bounds = array<i64: 1, 8, 128>}]} {
    %c0_i32 = arith.constant 0 : i32
    %0 = arith.cmpi eq, %arg1, %c0_i32 : i32
    %1 = arith.extui %0 : i1 to i32
    %c0_i32_0 = arith.constant 0 : i32
    %2 = arith.cmpi ne, %1, %c0_i32_0 : i32
    scf.if %2 {
      %cst_41 = arith.constant 0.000000e+00 : f32
      %68 = vector.broadcast %cst_41 : f32 to vector<1x8x128xf32>
      %c0_42 = arith.constant 0 : index
      %c0_43 = arith.constant 0 : index
      %c0_44 = arith.constant 0 : index
      %69 = vector.load %arg7[%c0_42, %c0_43, %c0_44] : memref<1x8x128xf32, #tpu.memory_space<vmem>>, vector<1x8x128xf32>
      tpu.vector_store %arg7[%c0_42, %c0_43, %c0_44], %68 {strides = array<i32>} : memref<1x8x128xf32, #tpu.memory_space<vmem>>, vector<1x8x128xf32>,
      %cst_45 = arith.constant 0.000000e+00 : f32
      %70 = vector.broadcast %cst_45 : f32 to vector<1x8x128xf32>
      %c0_46 = arith.constant 0 : index
      %c0_47 = arith.constant 0 : index
      %c0_48 = arith.constant 0 : index
      %71 = vector.load %arg8[%c0_46, %c0_47, %c0_48] : memref<1x8x128xf32, #tpu.memory_space<vmem>>, vector<1x8x128xf32>
      tpu.vector_store %arg8[%c0_46, %c0_47, %c0_48], %70 {strides = array<i32>} : memref<1x8x128xf32, #tpu.memory_space<vmem>>, vector<1x8x128xf32>,
      %cst_49 = arith.constant 0.000000e+00 : f32
      %72 = vector.broadcast %cst_49 : f32 to vector<1x8x128xf32>
      %c0_50 = arith.constant 0 : index
      %c0_51 = arith.constant 0 : index
      %c0_52 = arith.constant 0 : index
      %73 = vector.load %arg9[%c0_50, %c0_51, %c0_52] : memref<1x8x128xf32, #tpu.memory_space<vmem>>, vector<1x8x128xf32>
      tpu.vector_store %arg9[%c0_50, %c0_51, %c0_52], %72 {strides = array<i32>} : memref<1x8x128xf32, #tpu.memory_space<vmem>>, vector<1x8x128xf32>,
    } else {
    }
    %c0 = arith.constant 0 : index
    %c0_1 = arith.constant 0 : index
    %3 = vector.load %arg2[%c0, %c0_1] : memref<128x128xf32, #tpu.memory_space<vmem>>, vector<128x128xf32>
    %c0_2 = arith.constant 0 : index
    %c0_3 = arith.constant 0 : index
    %4 = vector.load %arg3[%c0_2, %c0_3] : memref<128x128xbf16, #tpu.memory_space<vmem>>, vector<128x128xbf16>
    %5 = arith.extf %4 : vector<128x128xbf16> to vector<128x128xf32>
    %cst = arith.constant 1.000000e+00 : f32
    %6 = vector.broadcast %cst : f32 to vector<128x128xf32>
    %7 = arith.cmpf oeq, %5, %6 : vector<128x128xf32>
    %cst_4 = arith.constant 1.000000e+00 : f32
    %8 = vector.broadcast %cst_4 : f32 to vector<128x128xf32>
    %9 = arith.subf %8, %3 : vector<128x128xf32>
    %10 = arith.select %7, %3, %9 : vector<128x128xi1>, vector<128x128xf32>
    %cst_5 = arith.constant 2.500000e-01 : f32
    %cst_6 = arith.constant 7.500000e-01 : f32
    %11 = vector.broadcast %cst_5 : f32 to vector<128x128xf32>
    %12 = vector.broadcast %cst_6 : f32 to vector<128x128xf32>
    %13 = arith.select %7, %11, %12 : vector<128x128xi1>, vector<128x128xf32>
    %cst_7 = arith.constant 1.000000e+00 : f32
    %14 = vector.broadcast %cst_7 : f32 to vector<128x128xf32>
    %15 = arith.subf %14, %10 : vector<128x128xf32>
    %16 = math.log %10 : vector<128x128xf32>
    %cst_8 = arith.constant -1.000000e+02 : f32
    %17 = vector.broadcast %cst_8 : f32 to vector<128x128xf32>
    %18 = arith.maximumf %16, %17 : vector<128x128xf32>
    %cst_9 = arith.constant 0.000000e+00 : f32
    %19 = vector.broadcast %cst_9 : f32 to vector<128x128xf32>
    %20 = arith.subf %19, %18 : vector<128x128xf32>
    %cst_10 = arith.constant -1.000000e+00 : f32
    %21 = vector.broadcast %cst_10 : f32 to vector<128x128xf32>
    %22 = arith.cmpf one, %5, %21 : vector<128x128xf32>
    %23 = arith.extui %22 : vector<128x128xi1> to vector<128x128xi32>
    %24 = arith.sitofp %23 : vector<128x128xi32> to vector<128x128xf32>
    %25 = arith.mulf %13, %24 : vector<128x128xf32>
    %26 = arith.mulf %15, %15 : vector<128x128xf32>
    %27 = arith.mulf %25, %26 : vector<128x128xf32>
    %28 = arith.mulf %27, %20 : vector<128x128xf32>
    %29 = vector.shape_cast %28 : vector<128x128xf32> to vector<16x8x128xf32>
    %cst_11 = arith.constant dense<0.000000e+00> : vector<8x128xf32>
    %30 = vector.multi_reduction <add>, %29, %cst_11 [0] : vector<16x8x128xf32> to vector<8x128xf32>
    %c0_12 = arith.constant 0 : index
    %c0_13 = arith.constant 0 : index
    %c0_14 = arith.constant 0 : index
    %31 = vector.load %arg7[%c0_12, %c0_13, %c0_14] : memref<1x8x128xf32, #tpu.memory_space<vmem>>, vector<1x8x128xf32>
    %32 = vector.shape_cast %31 : vector<1x8x128xf32> to vector<8x128xf32>
    %33 = arith.addf %32, %30 : vector<8x128xf32>
    %c0_15 = arith.constant 0 : index
    %c0_16 = arith.constant 0 : index
    %c0_17 = arith.constant 0 : index
    %34 = vector.load %arg7[%c0_15, %c0_16, %c0_17] : memref<1x8x128xf32, #tpu.memory_space<vmem>>, vector<1x8x128xf32>
    %35 = vector.shape_cast %34 : vector<1x8x128xf32> to vector<8x128xf32>
    %36 = vector.shape_cast %33 : vector<8x128xf32> to vector<1x8x128xf32>
    tpu.vector_store %arg7[%c0_15, %c0_16, %c0_17], %36 {strides = array<i32>} : memref<1x8x128xf32, #tpu.memory_space<vmem>>, vector<1x8x128xf32>,
    %c0_18 = arith.constant 0 : index
    %c0_19 = arith.constant 0 : index
    %37 = vector.load %arg4[%c0_18, %c0_19] : memref<64x128xf32, #tpu.memory_space<vmem>>, vector<64x128xf32>
    %c0_20 = arith.constant 0 : index
    %c0_21 = arith.constant 0 : index
    %38 = vector.load %arg5[%c0_20, %c0_21] : memref<64x128xf32, #tpu.memory_space<vmem>>, vector<64x128xf32>
    %c0_22 = arith.constant 0 : index
    %c0_23 = arith.constant 0 : index
    %39 = vector.load %arg6[%c0_22, %c0_23] : memref<64x128xbf16, #tpu.memory_space<vmem>>, vector<64x128xbf16>
    %40 = arith.extf %39 : vector<64x128xbf16> to vector<64x128xf32>
    %41 = arith.subf %37, %38 : vector<64x128xf32>
    %42 = math.absf %41 : vector<64x128xf32>
    %cst_24 = arith.constant 0.111111112 : f32
    %43 = vector.broadcast %cst_24 : f32 to vector<64x128xf32>
    %44 = arith.cmpf oge, %42, %43 : vector<64x128xf32>
    %cst_25 = arith.constant 0.055555556 : f32
    %45 = vector.broadcast %cst_25 : f32 to vector<64x128xf32>
    %46 = arith.subf %42, %45 : vector<64x128xf32>
    %47 = arith.mulf %42, %42 : vector<64x128xf32>
    %cst_26 = arith.constant 4.500000e+00 : f32
    %48 = vector.broadcast %cst_26 : f32 to vector<64x128xf32>
    %49 = arith.mulf %48, %47 : vector<64x128xf32>
    %50 = arith.select %44, %46, %49 : vector<64x128xi1>, vector<64x128xf32>
    %51 = arith.mulf %50, %40 : vector<64x128xf32>
    %52 = vector.shape_cast %51 : vector<64x128xf32> to vector<8x8x128xf32>
    %cst_27 = arith.constant dense<0.000000e+00> : vector<8x128xf32>
    %53 = vector.multi_reduction <add>, %52, %cst_27 [0] : vector<8x8x128xf32> to vector<8x128xf32>
    %c0_28 = arith.constant 0 : index
    %c0_29 = arith.constant 0 : index
    %c0_30 = arith.constant 0 : index
    %54 = vector.load %arg8[%c0_28, %c0_29, %c0_30] : memref<1x8x128xf32, #tpu.memory_space<vmem>>, vector<1x8x128xf32>
    %55 = vector.shape_cast %54 : vector<1x8x128xf32> to vector<8x128xf32>
    %56 = arith.addf %55, %53 : vector<8x128xf32>
    %c0_31 = arith.constant 0 : index
    %c0_32 = arith.constant 0 : index
    %c0_33 = arith.constant 0 : index
    %57 = vector.load %arg8[%c0_31, %c0_32, %c0_33] : memref<1x8x128xf32, #tpu.memory_space<vmem>>, vector<1x8x128xf32>
    %58 = vector.shape_cast %57 : vector<1x8x128xf32> to vector<8x128xf32>
    %59 = vector.shape_cast %56 : vector<8x128xf32> to vector<1x8x128xf32>
    tpu.vector_store %arg8[%c0_31, %c0_32, %c0_33], %59 {strides = array<i32>} : memref<1x8x128xf32, #tpu.memory_space<vmem>>, vector<1x8x128xf32>,
    %60 = vector.shape_cast %40 : vector<64x128xf32> to vector<8x8x128xf32>
    %cst_34 = arith.constant dense<0.000000e+00> : vector<8x128xf32>
    %61 = vector.multi_reduction <add>, %60, %cst_34 [0] : vector<8x8x128xf32> to vector<8x128xf32>
    %c0_35 = arith.constant 0 : index
    %c0_36 = arith.constant 0 : index
    %c0_37 = arith.constant 0 : index
    %62 = vector.load %arg9[%c0_35, %c0_36, %c0_37] : memref<1x8x128xf32, #tpu.memory_space<vmem>>, vector<1x8x128xf32>
    %63 = vector.shape_cast %62 : vector<1x8x128xf32> to vector<8x128xf32>
    %64 = arith.addf %63, %61 : vector<8x128xf32>
    %c0_38 = arith.constant 0 : index
    %c0_39 = arith.constant 0 : index
    %c0_40 = arith.constant 0 : index
    %65 = vector.load %arg9[%c0_38, %c0_39, %c0_40] : memref<1x8x128xf32, #tpu.memory_space<vmem>>, vector<1x8x128xf32>
    %66 = vector.shape_cast %65 : vector<1x8x128xf32> to vector<8x128xf32>
    %67 = vector.shape_cast %64 : vector<8x128xf32> to vector<1x8x128xf32>
    tpu.vector_store %arg9[%c0_38, %c0_39, %c0_40], %67 {strides = array<i32>} : memref<1x8x128xf32, #tpu.memory_space<vmem>>, vector<1x8x128xf32>,
    return
  }
  func.func @transform_0(%arg0: i32, %arg1: i32) -> (i32, i32) {
    %c1_i32 = arith.constant 1 : i32
    %0 = arith.muli %arg0, %c1_i32 : i32
    %1 = arith.addi %0, %arg1 : i32
    %c0_i32 = arith.constant 0 : i32
    %c0_i32_0 = arith.constant 0 : i32
    return %1, %c0_i32 : i32, i32
  }
  func.func @transform_1(%arg0: i32, %arg1: i32) -> (i32, i32) {
    %c1_i32 = arith.constant 1 : i32
    %0 = arith.muli %arg0, %c1_i32 : i32
    %1 = arith.addi %0, %arg1 : i32
    %c0_i32 = arith.constant 0 : i32
    %c0_i32_0 = arith.constant 0 : i32
    return %1, %c0_i32 : i32, i32
  }
  func.func @transform_2(%arg0: i32, %arg1: i32) -> (i32, i32) {
    %c1_i32 = arith.constant 1 : i32
    %0 = arith.muli %arg0, %c1_i32 : i32
    %1 = arith.addi %0, %arg1 : i32
    %c0_i32 = arith.constant 0 : i32
    %c0_i32_0 = arith.constant 0 : i32
    return %1, %c0_i32 : i32, i32
  }
  func.func @transform_3(%arg0: i32, %arg1: i32) -> (i32, i32) {
    %c1_i32 = arith.constant 1 : i32
    %0 = arith.muli %arg0, %c1_i32 : i32
    %1 = arith.addi %0, %arg1 : i32
    %c0_i32 = arith.constant 0 : i32
    %c0_i32_0 = arith.constant 0 : i32
    return %1, %c0_i32 : i32, i32
  }
  func.func @transform_4(%arg0: i32, %arg1: i32) -> (i32, i32) {
    %c1_i32 = arith.constant 1 : i32
    %0 = arith.muli %arg0, %c1_i32 : i32
    %1 = arith.addi %0, %arg1 : i32
    %c0_i32 = arith.constant 0 : i32
    %c0_i32_0 = arith.constant 0 : i32
    return %1, %c0_i32 : i32, i32
  }
  func.func @transform_5(%arg0: i32, %arg1: i32) -> (i32, i32, i32) {
    %c0_i32 = arith.constant 0 : i32
    %c0_i32_0 = arith.constant 0 : i32
    %c0_i32_1 = arith.constant 0 : i32
    return %arg0, %c0_i32, %c0_i32_0 : i32, i32, i32
  }
  func.func @transform_6(%arg0: i32, %arg1: i32) -> (i32, i32, i32) {
    %c0_i32 = arith.constant 0 : i32
    %c0_i32_0 = arith.constant 0 : i32
    %c0_i32_1 = arith.constant 0 : i32
    return %arg0, %c0_i32, %c0_i32_0 : i32, i32, i32
  }
  func.func @transform_7(%arg0: i32, %arg1: i32) -> (i32, i32, i32) {
    %c0_i32 = arith.constant 0 : i32
    %c0_i32_0 = arith.constant 0 : i32
    %c0_i32_1 = arith.constant 0 : i32
    return %arg0, %c0_i32, %c0_i32_0 : i32, i32, i32
  }
}

</mosaic_0001>

<llo_original>
// kernel: tpu_custom_call.1
$region0: #{tpu_custom_call.1}
  #allocation0 [shape = 'u32[]', space=smem, size = 0x4, offset = 0x4, fixed_abs, tag = 'smem constant byte address 0x4 - core index']
  #allocation1 [shape = 'u32[144,128]{1,0:T(1,128)}', space=vmem, size = 0x12000, scoped, tag = 'internal scratch']
  %s0 = inlined_call_operand.hbm [shape: f32[256,128], index: 0, kind: input, shape index: {}]
  %s1 = inlined_call_operand.hbm [shape: bf16[256,128], index: 1, kind: input, shape index: {}]
  %s2 = inlined_call_operand.hbm [shape: f32[128,128], index: 2, kind: input, shape index: {}]
  %s3 = inlined_call_operand.hbm [shape: f32[128,128], index: 3, kind: input, shape index: {}]
  %s4 = inlined_call_operand.hbm [shape: bf16[128,128], index: 4, kind: input, shape index: {}]
  %s5 = inlined_call_operand.hbm [shape: f32[2,8,128], index: 5, kind: output, shape index: {0}]
  %s6 = inlined_call_operand.hbm [shape: f32[2,8,128], index: 6, kind: output, shape index: {1}]
  %s7 = inlined_call_operand.hbm [shape: f32[2,8,128], index: 7, kind: output, shape index: {2}]
  %8 = xla_tuple %s5, %s6, %s7
  %s9 = sld [smem:[#allocation0]]
  $region93: #{tpu_custom_call.1} parent=0
    _
  %s11 = ssub.s32 1, %s9
  %s12 = scalar_select 0, %s11, %s9
  $region1: #{tpu_custom_call.1} parent=0
    #allocation2 [shape = 'u8[131072]{0}', space=vmem, size = 0x20000, scoped, tag = 'input window, operand 0']
    #allocation3 [shape = 's32[2]{0}', space=sflag, size = 0x8, scoped, tag = 'scoped memory for tpu_custom_call.1']
    #allocation4 [shape = 's32[2]{0}', space=sflag, size = 0x8, scoped, tag = 'scoped memory for tpu_custom_call.1']
    #allocation5 [shape = 'u8[65536]{0}', space=vmem, size = 0x10000, scoped, tag = 'input window, operand 1']
    #allocation6 [shape = 's32[2]{0}', space=sflag, size = 0x8, scoped, tag = 'scoped memory for tpu_custom_call.1']
    #allocation7 [shape = 'u8[65536]{0}', space=vmem, size = 0x10000, scoped, tag = 'input window, operand 2']
    #allocation8 [shape = 'u8[65536]{0}', space=vmem, size = 0x10000, scoped, tag = 'input window, operand 3']
    #allocation9 [shape = 's32[2]{0}', space=sflag, size = 0x8, scoped, tag = 'scoped memory for tpu_custom_call.1']
    #allocation10 [shape = 'u8[32768]{0}', space=vmem, size = 0x8000, scoped, tag = 'input window, operand 4']
    #allocation11 [shape = 'u8[8192]{0}', space=vmem, size = 0x2000, scoped, tag = 'output window, operand 0']
    #allocation12 [shape = 'u8[8192]{0}', space=vmem, size = 0x2000, scoped, tag = 'output window, operand 1']
    #allocation13 [shape = 's32[2]{0}', space=sflag, size = 0x8, scoped, tag = 'scoped memory for tpu_custom_call.1']
    #allocation14 [shape = 'u8[8192]{0}', space=vmem, size = 0x2000, scoped, tag = 'output window, operand 2']
    %13 = vsyncpa [#allocation3], 0
    %s14 = scalar_lea.sflag [#allocation3], 1
    %15 = vsyncpa %s14, 0
    %16 = vsyncpa [#allocation6], 0
    %s17 = scalar_lea.sflag [#allocation6], 1
    %18 = vsyncpa %s17, 0
    %19 = vsyncpa [#allocation9], 0
    %s20 = scalar_lea.sflag [#allocation9], 1
    %21 = vsyncpa %s20, 0
    %22 = vsyncpa [#allocation4], 0
    %s23 = scalar_lea.sflag [#allocation4], 1
    %24 = vsyncpa %s23, 0
    %25 = vsyncpa [#allocation13], 0
    %s26 = scalar_lea.sflag [#allocation13], 1
    %27 = vsyncpa %s26, 0
    loop: start=0, step=1, limit=4
    $region2: #{tpu_custom_call.1} parent=1 // loop_pre_header
      _
    $region3: #{tpu_custom_call.1} parent=1 // loop_header
      %s29 = sphi 0, %s33
      %p30 = scmp.ge.s32.totalorder %s29, 4
      %s36 = sphi 0, %s48
      %s37 = sphi 0, %s44
      %s38 = sphi 0, %s36
      %s39 = sphi 0, %s37
      %s40 = sphi 0, %s38
      %s41 = sphi 0, %s39
      %s53 = sphi 0, %s55
      %s56 = sphi 0, %s53
      %s57 = sphi 0, %s56
      %s73 = sphi 0, %s57
      %s81 = sphi 0, %s83
      %s84 = sphi 0, %s81
      %s85 = sphi 0, %s84
      %s101 = sphi 0, %s85
      %s109 = sphi 0, %s111
      %s112 = sphi 0, %s109
      %s113 = sphi 0, %s112
      %s129 = sphi 0, %s113
      %s137 = sphi 0, %s139
      %s140 = sphi 0, %s137
      %s141 = sphi 0, %s140
      %s157 = sphi 0, %s141
      %s165 = sphi 0, %s167
      %s168 = sphi 0, %s165
      %s169 = sphi 0, %s168
      %s185 = sphi 0, %s169
      %s191 = sphi 0, %s193
      %s194 = sphi 0, %s191
      %s195 = sphi 0, %s194
      %s211 = sphi 0, %s195
      %s217 = sphi 0, %s219
      %s220 = sphi 0, %s217
      %s221 = sphi 0, %s220
      %s237 = sphi 0, %s221
      %s243 = sphi 0, %s245
      %s246 = sphi 0, %s243
      %s247 = sphi 0, %s246
      %s263 = sphi 0, %s247
    $region4: #{tpu_custom_call.1} parent=1 // loop_header_branch
      %32 = sbr.rel (%p30) target = $region8
    $region5: #{tpu_custom_call.1} parent=1 // loop_body
      %s34 = ssub.s32 %s29, 1
      %s35 = ssub.s32 %s29, 2
      %s42 = sadd.s32 1, %s37
      %p43 = scmp.ge.s32.totalorder %s42, 1
      %s44 = scalar_select %p43, 0, %s42
      %s45 = sadd.s32 1, %s36
      %s46 = scalar_select %p43, %s45, %s36
      %p47 = scmp.ge.s32.totalorder %s46, 2
      %s48 = scalar_select %p47, 0, %s46
      %s49 = sadd.s32 %s36, %s37
      %s50 = sadd.s32 %s48, %s44
      %s51 = ssub.s32 %s49, %s50
      %p52 = scmp.eq.s32.totalorder %s51, 0
      %s54 = sadd.s32 %s53, 1
      %s55 = scalar_select %p52, %s53, %s54
      %p58 = pneg %p52
      %p59 = scmp.eq.s32.totalorder %s29, 1
      %p60 = por %p58, %p59
      %p61 = scmp.ne.s32.totalorder %s53, %s56
      %p62 = scmp.eq.s32.totalorder %s29, 0
      %p63 = por %p61, %p62
      %p64 = scmp.ne.s32.totalorder %s53, %s56
      %p65 = scmp.eq.s32.totalorder %s34, 1
      %p66 = por %p64, %p65
      %p67 = scmp.ne.s32.totalorder %s56, %s57
      %p68 = scmp.eq.s32.totalorder %s34, 0
      %p69 = por %p67, %p68
      %p70 = scmp.ne.s32.totalorder %s56, %s57
      %p71 = scmp.eq.s32.totalorder %s35, 1
      %p72 = por %p70, %p71
      %p74 = scmp.ne.s32.totalorder %s57, %s73
      %p75 = scmp.eq.s32.totalorder %s35, 0
      %p76 = por %p74, %p75
      %s77 = sadd.s32 %s36, %s37
      %s78 = sadd.s32 %s48, %s44
      %s79 = ssub.s32 %s77, %s78
      %p80 = scmp.eq.s32.totalorder %s79, 0
      %s82 = sadd.s32 %s81, 1
      %s83 = scalar_select %p80, %s81, %s82
      %p86 = pneg %p80
      %p87 = scmp.eq.s32.totalorder %s29, 1
      %p88 = por %p86, %p87
      %p89 = scmp.ne.s32.totalorder %s81, %s84
      %p90 = scmp.eq.s32.totalorder %s29, 0
      %p91 = por %p89, %p90
      %p92 = scmp.ne.s32.totalorder %s81, %s84
      %p93 = scmp.eq.s32.totalorder %s34, 1
      %p94 = por %p92, %p93
      %p95 = scmp.ne.s32.totalorder %s84, %s85
      %p96 = scmp.eq.s32.totalorder %s34, 0
      %p97 = por %p95, %p96
      %p98 = scmp.ne.s32.totalorder %s84, %s85
      %p99 = scmp.eq.s32.totalorder %s35, 1
      %p100 = por %p98, %p99
      %p102 = scmp.ne.s32.totalorder %s85, %s101
      %p103 = scmp.eq.s32.totalorder %s35, 0
      %p104 = por %p102, %p103
      %s105 = sadd.s32 %s36, %s37
      %s106 = sadd.s32 %s48, %s44
      %s107 = ssub.s32 %s105, %s106
      %p108 = scmp.eq.s32.totalorder %s107, 0
      %s110 = sadd.s32 %s109, 1
      %s111 = scalar_select %p108, %s109, %s110
      %p114 = pneg %p108
      %p115 = scmp.eq.s32.totalorder %s29, 1
      %p116 = por %p114, %p115
      %p117 = scmp.ne.s32.totalorder %s109, %s112
      %p118 = scmp.eq.s32.totalorder %s29, 0
      %p119 = por %p117, %p118
      %p120 = scmp.ne.s32.totalorder %s109, %s112
      %p121 = scmp.eq.s32.totalorder %s34, 1
      %p122 = por %p120, %p121
      %p123 = scmp.ne.s32.totalorder %s112, %s113
      %p124 = scmp.eq.s32.totalorder %s34, 0
      %p125 = por %p123, %p124
      %p126 = scmp.ne.s32.totalorder %s112, %s113
      %p127 = scmp.eq.s32.totalorder %s35, 1
      %p128 = por %p126, %p127
      %p130 = scmp.ne.s32.totalorder %s113, %s129
      %p131 = scmp.eq.s32.totalorder %s35, 0
      %p132 = por %p130, %p131
      %s133 = sadd.s32 %s36, %s37
      %s134 = sadd.s32 %s48, %s44
      %s135 = ssub.s32 %s133, %s134
      %p136 = scmp.eq.s32.totalorder %s135, 0
      %s138 = sadd.s32 %s137, 1
      %s139 = scalar_select %p136, %s137, %s138
      %p142 = pneg %p136
      %p143 = scmp.eq.s32.totalorder %s29, 1
      %p144 = por %p142, %p143
      %p145 = scmp.ne.s32.totalorder %s137, %s140
      %p146 = scmp.eq.s32.totalorder %s29, 0
      %p147 = por %p145, %p146
      %p148 = scmp.ne.s32.totalorder %s137, %s140
      %p149 = scmp.eq.s32.totalorder %s34, 1
      %p150 = por %p148, %p149
      %p151 = scmp.ne.s32.totalorder %s140, %s141
      %p152 = scmp.eq.s32.totalorder %s34, 0
      %p153 = por %p151, %p152
      %p154 = scmp.ne.s32.totalorder %s140, %s141
      %p155 = scmp.eq.s32.totalorder %s35, 1
      %p156 = por %p154, %p155
      %p158 = scmp.ne.s32.totalorder %s141, %s157
      %p159 = scmp.eq.s32.totalorder %s35, 0
      %p160 = por %p158, %p159
      %s161 = sadd.s32 %s36, %s37
      %s162 = sadd.s32 %s48, %s44
      %s163 = ssub.s32 %s161, %s162
      %p164 = scmp.eq.s32.totalorder %s163, 0
      %s166 = sadd.s32 %s165, 1
      %s167 = scalar_select %p164, %s165, %s166
      %p170 = pneg %p164
      %p171 = scmp.eq.s32.totalorder %s29, 1
      %p172 = por %p170, %p171
      %p173 = scmp.ne.s32.totalorder %s165, %s168
      %p174 = scmp.eq.s32.totalorder %s29, 0
      %p175 = por %p173, %p174
      %p176 = scmp.ne.s32.totalorder %s165, %s168
      %p177 = scmp.eq.s32.totalorder %s34, 1
      %p178 = por %p176, %p177
      %p179 = scmp.ne.s32.totalorder %s168, %s169
      %p180 = scmp.eq.s32.totalorder %s34, 0
      %p181 = por %p179, %p180
      %p182 = scmp.ne.s32.totalorder %s168, %s169
      %p183 = scmp.eq.s32.totalorder %s35, 1
      %p184 = por %p182, %p183
      %p186 = scmp.ne.s32.totalorder %s169, %s185
      %p187 = scmp.eq.s32.totalorder %s35, 0
      %p188 = por %p186, %p187
      %s189 = ssub.s32 %s36, %s48
      %p190 = scmp.eq.s32.totalorder %s189, 0
      %s192 = sadd.s32 %s191, 1
      %s193 = scalar_select %p190, %s191, %s192
      %p196 = pneg %p190
      %p197 = scmp.eq.s32.totalorder %s29, 1
      %p198 = por %p196, %p197
      %p199 = scmp.ne.s32.totalorder %s191, %s194
      %p200 = scmp.eq.s32.totalorder %s29, 0
      %p201 = por %p199, %p200
      %p202 = scmp.ne.s32.totalorder %s191, %s194
      %p203 = scmp.eq.s32.totalorder %s34, 1
      %p204 = por %p202, %p203
      %p205 = scmp.ne.s32.totalorder %s194, %s195
      %p206 = scmp.eq.s32.totalorder %s34, 0
      %p207 = por %p205, %p206
      %p208 = scmp.ne.s32.totalorder %s194, %s195
      %p209 = scmp.eq.s32.totalorder %s35, 1
      %p210 = por %p208, %p209
      %p212 = scmp.ne.s32.totalorder %s195, %s211
      %p213 = scmp.eq.s32.totalorder %s35, 0
      %p214 = por %p212, %p213
      %s215 = ssub.s32 %s36, %s48
      %p216 = scmp.eq.s32.totalorder %s215, 0
      %s218 = sadd.s32 %s217, 1
      %s219 = scalar_select %p216, %s217, %s218
      %p222 = pneg %p216
      %p223 = scmp.eq.s32.totalorder %s29, 1
      %p224 = por %p222, %p223
      %p225 = scmp.ne.s32.totalorder %s217, %s220
      %p226 = scmp.eq.s32.totalorder %s29, 0
      %p227 = por %p225, %p226
      %p228 = scmp.ne.s32.totalorder %s217, %s220
      %p229 = scmp.eq.s32.totalorder %s34, 1
      %p230 = por %p228, %p229
      %p231 = scmp.ne.s32.totalorder %s220, %s221
      %p232 = scmp.eq.s32.totalorder %s34, 0
      %p233 = por %p231, %p232
      %p234 = scmp.ne.s32.totalorder %s220, %s221
      %p235 = scmp.eq.s32.totalorder %s35, 1
      %p236 = por %p234, %p235
      %p238 = scmp.ne.s32.totalorder %s221, %s237
      %p239 = scmp.eq.s32.totalorder %s35, 0
      %p240 = por %p238, %p239
      %s241 = ssub.s32 %s36, %s48
      %p242 = scmp.eq.s32.totalorder %s241, 0
      %s244 = sadd.s32 %s243, 1
      %s245 = scalar_select %p242, %s243, %s244
      %p248 = pneg %p242
      %p249 = scmp.eq.s32.totalorder %s29, 1
      %p250 = por %p248, %p249
      %p251 = scmp.ne.s32.totalorder %s243, %s246
      %p252 = scmp.eq.s32.totalorder %s29, 0
      %p253 = por %p251, %p252
      %p254 = scmp.ne.s32.totalorder %s243, %s246
      %p255 = scmp.eq.s32.totalorder %s34, 1
      %p256 = por %p254, %p255
      %p257 = scmp.ne.s32.totalorder %s246, %s247
      %p258 = scmp.eq.s32.totalorder %s34, 0
      %p259 = por %p257, %p258
      %p260 = scmp.ne.s32.totalorder %s246, %s247
      %p261 = scmp.eq.s32.totalorder %s35, 1
      %p262 = por %p260, %p261
      %p264 = scmp.ne.s32.totalorder %s247, %s263
      %p265 = scmp.eq.s32.totalorder %s35, 0
      %p266 = por %p264, %p265
      %p267 = scmp.le.s32.totalorder 1, %s29
      %p268 = scmp.lt.s32.totalorder %s29, 3
      %p269 = pnand %p267, %p268
      %p270 = pneg %p269
      // Predicated region
      $region9: #{tpu_custom_call.1} parent=5 // pred_check
        _
      $region10: #{tpu_custom_call.1} parent=5 // pred_check_branch
        %272 = sbr.rel (%p269) target = $region12
      $region11: #{tpu_custom_call.1} parent=5 // pred_region
        %s273 = ssub.s32 %s29, 1
      $region12: #{tpu_custom_call.1} parent=5 // pred_fallthru
        _
      %p274 = scmp.lt.s32.totalorder %s29, 2
      // Predicated region
      $region13: #{tpu_custom_call.1} parent=5 // pred_check
        %p275 = pneg %p274
      $region14: #{tpu_custom_call.1} parent=5 // pred_check_branch
        %277 = sbr.rel (%p275) target = $region16
      $region15: #{tpu_custom_call.1} parent=5 // pred_region
        // Predicated region
        $region17: #{tpu_custom_call.1} parent=15 // pred_check
          %p278 = pneg %p63
        $region18: #{tpu_custom_call.1} parent=15 // pred_check_branch
          %280 = sbr.rel (%p278) target = $region20
        $region19: #{tpu_custom_call.1} parent=15 // pred_region
          %s281 = sand.u32 %s53, 1
          %s282 = scalar_lea.sflag [#allocation3], %s281
          %s283 = sand.u32 %s53, 1
          %s284 = smul.addr %s283, 128
          %s285 = scalar_lea.vmem [#allocation2], %s284
          %s286 = sadd.s32 %s36, %s37
          %s287 = smul.u32 16, %s286
          %s289 = ssub.s32 2048, 2048
          %290 = vsyncadd %s282, %s289
          %s291 = smul.addr %s287, 128
          %s292 = scalar_lea.hbm %s0, %s291
          %s293 = sshll.u32 %s285, 4
          %s294 = int_to_ptr.vmem [resolvable:$true] %s293
          %299 = dma.hbm_to_vmem [thread:$0]  %s292, 2048, %s294, %s282, 128, 128, 8
        $region20: #{tpu_custom_call.1} parent=15 // pred_fallthru
          _
        // Predicated region
        $region21: #{tpu_custom_call.1} parent=15 // pred_check
          %p300 = pneg %p91
        $region22: #{tpu_custom_call.1} parent=15 // pred_check_branch
          %302 = sbr.rel (%p300) target = $region24
        $region23: #{tpu_custom_call.1} parent=15 // pred_region
          %s303 = sand.u32 %s29, 1
          %s304 = scalar_lea.sflag [#allocation6], %s303
          %s305 = sand.u32 %s81, 1
          %s306 = smul.addr %s305, 64
          %s307 = scalar_lea.vmem [#allocation5], %s306
          %s308 = sadd.s32 %s36, %s37
          %s309 = smul.u32 16, %s308
          %s311 = ssub.s32 1024, 1024
          %312 = vsyncadd %s304, %s311
          %s313 = smul.addr %s309, 64
          %s314 = scalar_lea.hbm %s1, %s313
          %s315 = sshll.u32 %s307, 4
          %s316 = int_to_ptr.vmem [resolvable:$true] %s315
          %321 = dma.hbm_to_vmem [thread:$0]  %s314, 1024, %s316, %s304, 64, 64, 4
        $region24: #{tpu_custom_call.1} parent=15 // pred_fallthru
          _
        // Predicated region
        $region25: #{tpu_custom_call.1} parent=15 // pred_check
          %p322 = pneg %p119
        $region26: #{tpu_custom_call.1} parent=15 // pred_check_branch
          %324 = sbr.rel (%p322) target = $region28
        $region27: #{tpu_custom_call.1} parent=15 // pred_region
          %s325 = sand.u32 %s29, 1
          %s326 = scalar_lea.sflag [#allocation6], %s325
          %s327 = sand.u32 %s109, 1
          %s328 = smul.addr %s327, 64
          %s329 = scalar_lea.vmem [#allocation7], %s328
          %s330 = sadd.s32 %s36, %s37
          %s331 = smul.u32 8, %s330
          %s333 = ssub.s32 1024, 1024
          %334 = vsyncadd %s326, %s333
          %s335 = smul.addr %s331, 128
          %s336 = scalar_lea.hbm %s2, %s335
          %s337 = sshll.u32 %s329, 4
          %s338 = int_to_ptr.vmem [resolvable:$true] %s337
          %343 = dma.hbm_to_vmem [thread:$0]  %s336, 1024, %s338, %s326, 128, 128, 8
        $region28: #{tpu_custom_call.1} parent=15 // pred_fallthru
          _
        // Predicated region
        $region29: #{tpu_custom_call.1} parent=15 // pred_check
          %p344 = pneg %p147
        $region30: #{tpu_custom_call.1} parent=15 // pred_check_branch
          %346 = sbr.rel (%p344) target = $region32
        $region31: #{tpu_custom_call.1} parent=15 // pred_region
          %s347 = sand.u32 %s29, 1
          %s348 = scalar_lea.sflag [#allocation9], %s347
          %s349 = sand.u32 %s137, 1
          %s350 = smul.addr %s349, 64
          %s351 = scalar_lea.vmem [#allocation8], %s350
          %s352 = sadd.s32 %s36, %s37
          %s353 = smul.u32 8, %s352
          %s355 = ssub.s32 1024, 1024
          %356 = vsyncadd %s348, %s355
          %s357 = smul.addr %s353, 128
          %s358 = scalar_lea.hbm %s3, %s357
          %s359 = sshll.u32 %s351, 4
          %s360 = int_to_ptr.vmem [resolvable:$true] %s359
          %365 = dma.hbm_to_vmem [thread:$0]  %s358, 1024, %s360, %s348, 128, 128, 8
        $region32: #{tpu_custom_call.1} parent=15 // pred_fallthru
          _
        // Predicated region
        $region33: #{tpu_custom_call.1} parent=15 // pred_check
          %p366 = pneg %p175
        $region34: #{tpu_custom_call.1} parent=15 // pred_check_branch
          %368 = sbr.rel (%p366) target = $region36
        $region35: #{tpu_custom_call.1} parent=15 // pred_region
          %s369 = sand.u32 %s29, 1
          %s370 = scalar_lea.sflag [#allocation9], %s369
          %s371 = sand.u32 %s165, 1
          %s372 = smul.addr %s371, 32
          %s373 = scalar_lea.vmem [#allocation10], %s372
          %s374 = sadd.s32 %s36, %s37
          %s375 = smul.u32 8, %s374
          %s377 = ssub.s32 512, 512
          %378 = vsyncadd %s370, %s377
          %s379 = smul.addr %s375, 64
          %s380 = scalar_lea.hbm %s4, %s379
          %s381 = sshll.u32 %s373, 4
          %s382 = int_to_ptr.vmem [resolvable:$true] %s381
          %387 = dma.hbm_to_vmem [thread:$0]  %s380, 512, %s382, %s370, 64, 64, 4
        $region36: #{tpu_custom_call.1} parent=15 // pred_fallthru
          _
      $region16: #{tpu_custom_call.1} parent=5 // pred_fallthru
        _
      %p388 = scmp.le.s32.totalorder 1, %s29
      %p389 = scmp.lt.s32.totalorder %s29, 3
      %p390 = pnand %p388, %p389
      %p391 = pneg %p390
      // Predicated region
      $region37: #{tpu_custom_call.1} parent=5 // pred_check
        _
      $region38: #{tpu_custom_call.1} parent=5 // pred_check_branch
        %393 = sbr.rel (%p390) target = $region40
      $region39: #{tpu_custom_call.1} parent=5 // pred_region
        %s394 = ssub.s32 %s29, 1
        %s395 = sand.u32 %s56, 1
        %s396 = scalar_lea.sflag [#allocation3], %s395
        %s397 = sand.u32 %s56, 1
        %s398 = smul.addr %s397, 128
        %s399 = scalar_lea.vmem [#allocation2], %s398
        // Predicated region
        $region41: #{tpu_custom_call.1} parent=39 // pred_check
          %p400 = pneg %p69
        $region42: #{tpu_custom_call.1} parent=39 // pred_check_branch
          %402 = sbr.rel (%p400) target = $region44
        $region43: #{tpu_custom_call.1} parent=39 // pred_region
          %403 = dma.done %s396, 2048
        $region44: #{tpu_custom_call.1} parent=39 // pred_fallthru
          _
        %s404 = sand.u32 %s34, 1
        %s405 = scalar_lea.sflag [#allocation6], %s404
        %s406 = sand.u32 %s84, 1
        %s407 = smul.addr %s406, 64
        %s408 = scalar_lea.vmem [#allocation5], %s407
        // Predicated region
        $region45: #{tpu_custom_call.1} parent=39 // pred_check
          %p409 = pneg %p97
        $region46: #{tpu_custom_call.1} parent=39 // pred_check_branch
          %411 = sbr.rel (%p409) target = $region48
        $region47: #{tpu_custom_call.1} parent=39 // pred_region
          %412 = dma.done %s405, 1024
        $region48: #{tpu_custom_call.1} parent=39 // pred_fallthru
          _
        %s413 = sand.u32 %s34, 1
        %s414 = scalar_lea.sflag [#allocation6], %s413
        %s415 = sand.u32 %s112, 1
        %s416 = smul.addr %s415, 64
        %s417 = scalar_lea.vmem [#allocation7], %s416
        // Predicated region
        $region49: #{tpu_custom_call.1} parent=39 // pred_check
          %p418 = pneg %p125
        $region50: #{tpu_custom_call.1} parent=39 // pred_check_branch
          %420 = sbr.rel (%p418) target = $region52
        $region51: #{tpu_custom_call.1} parent=39 // pred_region
          %421 = dma.done %s414, 1024
        $region52: #{tpu_custom_call.1} parent=39 // pred_fallthru
          _
        %s422 = sand.u32 %s34, 1
        %s423 = scalar_lea.sflag [#allocation9], %s422
        %s424 = sand.u32 %s140, 1
        %s425 = smul.addr %s424, 64
        %s426 = scalar_lea.vmem [#allocation8], %s425
        // Predicated region
        $region53: #{tpu_custom_call.1} parent=39 // pred_check
          %p427 = pneg %p153
        $region54: #{tpu_custom_call.1} parent=39 // pred_check_branch
          %429 = sbr.rel (%p427) target = $region56
        $region55: #{tpu_custom_call.1} parent=39 // pred_region
          %430 = dma.done %s423, 1024
        $region56: #{tpu_custom_call.1} parent=39 // pred_fallthru
          _
        %s431 = sand.u32 %s34, 1
        %s432 = scalar_lea.sflag [#allocation9], %s431
        %s433 = sand.u32 %s168, 1
        %s434 = smul.addr %s433, 32
        %s435 = scalar_lea.vmem [#allocation10], %s434
        // Predicated region
        $region57: #{tpu_custom_call.1} parent=39 // pred_check
          %p436 = pneg %p181
        $region58: #{tpu_custom_call.1} parent=39 // pred_check_branch
          %438 = sbr.rel (%p436) target = $region60
        $region59: #{tpu_custom_call.1} parent=39 // pred_region
          %439 = dma.done %s432, 512
        $region60: #{tpu_custom_call.1} parent=39 // pred_fallthru
          _
        %s440 = sand.u32 %s56, 1
        %s441 = scalar_lea.sflag [#allocation3], %s440
        %s442 = sand.u32 %s56, 1
        %s443 = smul.addr %s442, 128
        %s444 = scalar_lea.vmem [#allocation2], %s443
        %p445 = pneg %p69
        %p446 = pneg %p66
        %s447 = sand.u32 %s34, 1
        %s448 = scalar_lea.sflag [#allocation6], %s447
        %s449 = sand.u32 %s84, 1
        %s450 = smul.addr %s449, 64
        %s451 = scalar_lea.vmem [#allocation5], %s450
        %p452 = pneg %p97
        %p453 = pneg %p94
        %s454 = sand.u32 %s34, 1
        %s455 = scalar_lea.sflag [#allocation6], %s454
        %s456 = sand.u32 %s112, 1
        %s457 = smul.addr %s456, 64
        %s458 = scalar_lea.vmem [#allocation7], %s457
        %p459 = pneg %p125
        %p460 = pneg %p122
        %s461 = sand.u32 %s34, 1
        %s462 = scalar_lea.sflag [#allocation9], %s461
        %s463 = sand.u32 %s140, 1
        %s464 = smul.addr %s463, 64
        %s465 = scalar_lea.vmem [#allocation8], %s464
        %p466 = pneg %p153
        %p467 = pneg %p150
        %s468 = sand.u32 %s34, 1
        %s469 = scalar_lea.sflag [#allocation9], %s468
        %s470 = sand.u32 %s168, 1
        %s471 = smul.addr %s470, 32
        %s472 = scalar_lea.vmem [#allocation10], %s471
        %p473 = pneg %p181
        %p474 = pneg %p178
        %p475 = pneg %p207
        %p476 = pneg %p204
        %s477 = sand.u32 %s194, 1
        %s478 = scalar_lea.sflag [#allocation4], %s477
        %s479 = sand.u32 %s194, 1
        %s480 = smul.addr %s479, 8
        %s481 = scalar_lea.vmem [#allocation11], %s480
        %p482 = pneg %p233
        %p483 = pneg %p230
        %s484 = sand.u32 %s34, 1
        %s485 = scalar_lea.sflag [#allocation13], %s484
        %s486 = sand.u32 %s220, 1
        %s487 = smul.addr %s486, 8
        %s488 = scalar_lea.vmem [#allocation12], %s487
        %p489 = pneg %p259
        %p490 = pneg %p256
        %s491 = sand.u32 %s34, 1
        %s492 = scalar_lea.sflag [#allocation13], %s491
        %s493 = sand.u32 %s246, 1
        %s494 = smul.addr %s493, 8
        %s495 = scalar_lea.vmem [#allocation14], %s494
        %s496 = sadd.s32 %s38, %s39
        %s497 = smul.u32 16, %s496
        %s498 = sadd.s32 %s38, %s39
        %s499 = smul.u32 16, %s498
        %s500 = sadd.s32 %s38, %s39
        %s501 = smul.u32 8, %s500
        %s502 = sadd.s32 %s38, %s39
        %s503 = smul.u32 8, %s502
        %s504 = sadd.s32 %s38, %s39
        %s505 = smul.u32 8, %s504
        %p506 = scmp.eq.s32.totalorder %s39, 0
        // Predicated region
        $region61: #{tpu_custom_call.1} parent=39 // pred_check
          %p507 = pneg %p506
        $region62: #{tpu_custom_call.1} parent=39 // pred_check_branch
          %509 = sbr.rel (%p507) target = $region64
        $region63: #{tpu_custom_call.1} parent=39 // pred_region
          %510 = vst [vmem:[%s481] sm:$0xff] 0.0
          %511 = vst [vmem:[%s488] sm:$0xff] 0.0
          %512 = vst [vmem:[%s495] sm:$0xff] 0.0
        $region64: #{tpu_custom_call.1} parent=39 // pred_fallthru
          _
        %v513 = vld [vmem:[%s399] sm:$0xff]
        %v514 = vld [vmem:[%s399 + $0x8] sm:$0xff]
        %v515 = vld [vmem:[%s399 + $0x10] sm:$0xff]
        %v516 = vld [vmem:[%s399 + $0x18] sm:$0xff]
        %v517 = vld [vmem:[%s399 + $0x20] sm:$0xff]
        %v518 = vld [vmem:[%s399 + $0x28] sm:$0xff]
        %v519 = vld [vmem:[%s399 + $0x30] sm:$0xff]
        %v520 = vld [vmem:[%s399 + $0x38] sm:$0xff]
        %v521 = vld [vmem:[%s399 + $0x40] sm:$0xff]
        %v522 = vld [vmem:[%s399 + $0x48] sm:$0xff]
        %v523 = vld [vmem:[%s399 + $0x50] sm:$0xff]
        %v524 = vld [vmem:[%s399 + $0x58] sm:$0xff]
        %v525 = vld [vmem:[%s399 + $0x60] sm:$0xff]
        %v526 = vld [vmem:[%s399 + $0x68] sm:$0xff]
        %v527 = vld [vmem:[%s399 + $0x70] sm:$0xff]
        %v528 = vld [vmem:[%s399 + $0x78] sm:$0xff]
        %v529 = vld [vmem:[%s408] sm:$0xf]
        %v530 = vld [vmem:[%s408 + $0x4] sm:$0xf]
        %v531 = vld [vmem:[%s408 + $0x8] sm:$0xf]
        %v532 = vld [vmem:[%s408 + $0xc] sm:$0xf]
        %v533 = vld [vmem:[%s408 + $0x10] sm:$0xf]
        %v534 = vld [vmem:[%s408 + $0x14] sm:$0xf]
        %v535 = vld [vmem:[%s408 + $0x18] sm:$0xf]
        %v536 = vld [vmem:[%s408 + $0x1c] sm:$0xf]
        %v537 = vld [vmem:[%s408 + $0x20] sm:$0xf]
        %v538 = vld [vmem:[%s408 + $0x24] sm:$0xf]
        %v539 = vld [vmem:[%s408 + $0x28] sm:$0xf]
        %v540 = vld [vmem:[%s408 + $0x2c] sm:$0xf]
        %v541 = vld [vmem:[%s408 + $0x30] sm:$0xf]
        %v542 = vld [vmem:[%s408 + $0x34] sm:$0xf]
        %v543 = vld [vmem:[%s408 + $0x38] sm:$0xf]
        %v544 = vld [vmem:[%s408 + $0x3c] sm:$0xf]
        %v545 = vunpack.c.l.bf16 %v529
        %v546 = vunpack.c.l.bf16 %v530
        %v547 = vunpack.c.l.bf16 %v531
        %v548 = vunpack.c.l.bf16 %v532
        %v549 = vunpack.c.l.bf16 %v533
        %v550 = vunpack.c.l.bf16 %v534
        %v551 = vunpack.c.l.bf16 %v535
        %v552 = vunpack.c.l.bf16 %v536
        %v553 = vunpack.c.l.bf16 %v537
        %v554 = vunpack.c.l.bf16 %v538
        %v555 = vunpack.c.l.bf16 %v539
        %v556 = vunpack.c.l.bf16 %v540
        %v557 = vunpack.c.l.bf16 %v541
        %v558 = vunpack.c.l.bf16 %v542
        %v559 = vunpack.c.l.bf16 %v543
        %v560 = vunpack.c.l.bf16 %v544
        %vm561 = vcmp.eq.f32.partialorder %v545, 1.0
        %vm562 = vcmp.eq.f32.partialorder %v546, 1.0
        %vm563 = vcmp.eq.f32.partialorder %v547, 1.0
        %vm564 = vcmp.eq.f32.partialorder %v548, 1.0
        %vm565 = vcmp.eq.f32.partialorder %v549, 1.0
        %vm566 = vcmp.eq.f32.partialorder %v550, 1.0
        %vm567 = vcmp.eq.f32.partialorder %v551, 1.0
        %vm568 = vcmp.eq.f32.partialorder %v552, 1.0
        %vm569 = vcmp.eq.f32.partialorder %v553, 1.0
        %vm570 = vcmp.eq.f32.partialorder %v554, 1.0
        %vm571 = vcmp.eq.f32.partialorder %v555, 1.0
        %vm572 = vcmp.eq.f32.partialorder %v556, 1.0
        %vm573 = vcmp.eq.f32.partialorder %v557, 1.0
        %vm574 = vcmp.eq.f32.partialorder %v558, 1.0
        %vm575 = vcmp.eq.f32.partialorder %v559, 1.0
        %vm576 = vcmp.eq.f32.partialorder %v560, 1.0
        %v577 = vsub.f32 1.0, %v513
        %v578 = vsub.f32 1.0, %v514
        %v579 = vsub.f32 1.0, %v515
        %v580 = vsub.f32 1.0, %v516
        %v581 = vsub.f32 1.0, %v517
        %v582 = vsub.f32 1.0, %v518
        %v583 = vsub.f32 1.0, %v519
        %v584 = vsub.f32 1.0, %v520
        %v585 = vsub.f32 1.0, %v521
        %v586 = vsub.f32 1.0, %v522
        %v587 = vsub.f32 1.0, %v523
        %v588 = vsub.f32 1.0, %v524
        %v589 = vsub.f32 1.0, %v525
        %v590 = vsub.f32 1.0, %v526
        %v591 = vsub.f32 1.0, %v527
        %v592 = vsub.f32 1.0, %v528
        %v593 = vsel %vm561, %v513, %v577
        %v594 = vsel %vm562, %v514, %v578
        %v595 = vsel %vm563, %v515, %v579
        %v596 = vsel %vm564, %v516, %v580
        %v597 = vsel %vm565, %v517, %v581
        %v598 = vsel %vm566, %v518, %v582
        %v599 = vsel %vm567, %v519, %v583
        %v600 = vsel %vm568, %v520, %v584
        %v601 = vsel %vm569, %v521, %v585
        %v602 = vsel %vm570, %v522, %v586
        %v603 = vsel %vm571, %v523, %v587
        %v604 = vsel %vm572, %v524, %v588
        %v605 = vsel %vm573, %v525, %v589
        %v606 = vsel %vm574, %v526, %v590
        %v607 = vsel %vm575, %v527, %v591
        %v608 = vsel %vm576, %v528, %v592
        %v609 = vsel %vm561, 0.25, 0.75
        %v610 = vsel %vm562, 0.25, 0.75
        %v611 = vsel %vm563, 0.25, 0.75
        %v612 = vsel %vm564, 0.25, 0.75
        %v613 = vsel %vm565, 0.25, 0.75
        %v614 = vsel %vm566, 0.25, 0.75
        %v615 = vsel %vm567, 0.25, 0.75
        %v616 = vsel %vm568, 0.25, 0.75
        %v617 = vsel %vm569, 0.25, 0.75
        %v618 = vsel %vm570, 0.25, 0.75
        %v619 = vsel %vm571, 0.25, 0.75
        %v620 = vsel %vm572, 0.25, 0.75
        %v621 = vsel %vm573, 0.25, 0.75
        %v622 = vsel %vm574, 0.25, 0.75
        %v623 = vsel %vm575, 0.25, 0.75
        %v624 = vsel %vm576, 0.25, 0.75
        %v625 = vsub.f32 1.0, %v593
        %v626 = vsub.f32 1.0, %v594
        %v627 = vsub.f32 1.0, %v595
        %v628 = vsub.f32 1.0, %v596
        %v629 = vsub.f32 1.0, %v597
        %v630 = vsub.f32 1.0, %v598
        %v631 = vsub.f32 1.0, %v599
        %v632 = vsub.f32 1.0, %v600
        %v633 = vsub.f32 1.0, %v601
        %v634 = vsub.f32 1.0, %v602
        %v635 = vsub.f32 1.0, %v603
        %v636 = vsub.f32 1.0, %v604
        %v637 = vsub.f32 1.0, %v605
        %v638 = vsub.f32 1.0, %v606
        %v639 = vsub.f32 1.0, %v607
        %v640 = vsub.f32 1.0, %v608
        %v641 = vlog2.pop %v593
        %v642 = vmul.f32 %v641, 0.6931472
        %v643 = vlog2.pop %v594
        %v644 = vmul.f32 %v643, 0.6931472
        %v645 = vlog2.pop %v595
        %v646 = vmul.f32 %v645, 0.6931472
        %v647 = vlog2.pop %v596
        %v648 = vmul.f32 %v647, 0.6931472
        %v649 = vlog2.pop %v597
        %v650 = vmul.f32 %v649, 0.6931472
        %v651 = vlog2.pop %v598
        %v652 = vmul.f32 %v651, 0.6931472
        %v653 = vlog2.pop %v599
        %v654 = vmul.f32 %v653, 0.6931472
        %v655 = vlog2.pop %v600
        %v656 = vmul.f32 %v655, 0.6931472
        %v657 = vlog2.pop %v601
        %v658 = vmul.f32 %v657, 0.6931472
        %v659 = vlog2.pop %v602
        %v660 = vmul.f32 %v659, 0.6931472
        %v661 = vlog2.pop %v603
        %v662 = vmul.f32 %v661, 0.6931472
        %v663 = vlog2.pop %v604
        %v664 = vmul.f32 %v663, 0.6931472
        %v665 = vlog2.pop %v605
        %v666 = vmul.f32 %v665, 0.6931472
        %v667 = vlog2.pop %v606
        %v668 = vmul.f32 %v667, 0.6931472
        %v669 = vlog2.pop %v607
        %v670 = vmul.f32 %v669, 0.6931472
        %v671 = vlog2.pop %v608
        %v672 = vmul.f32 %v671, 0.6931472
        %v673 = vmax.f32 %v642, -100.0
        %v674 = vmax.f32 %v644, -100.0
        %v675 = vmax.f32 %v646, -100.0
        %v676 = vmax.f32 %v648, -100.0
        %v677 = vmax.f32 %v650, -100.0
        %v678 = vmax.f32 %v652, -100.0
        %v679 = vmax.f32 %v654, -100.0
        %v680 = vmax.f32 %v656, -100.0
        %v681 = vmax.f32 %v658, -100.0
        %v682 = vmax.f32 %v660, -100.0
        %v683 = vmax.f32 %v662, -100.0
        %v684 = vmax.f32 %v664, -100.0
        %v685 = vmax.f32 %v666, -100.0
        %v686 = vmax.f32 %v668, -100.0
        %v687 = vmax.f32 %v670, -100.0
        %v688 = vmax.f32 %v672, -100.0
        %v689 = vsub.f32 0.0, %v673
        %v690 = vsub.f32 0.0, %v674
        %v691 = vsub.f32 0.0, %v675
        %v692 = vsub.f32 0.0, %v676
        %v693 = vsub.f32 0.0, %v677
        %v694 = vsub.f32 0.0, %v678
        %v695 = vsub.f32 0.0, %v679
        %v696 = vsub.f32 0.0, %v680
        %v697 = vsub.f32 0.0, %v681
        %v698 = vsub.f32 0.0, %v682
        %v699 = vsub.f32 0.0, %v683
        %v700 = vsub.f32 0.0, %v684
        %v701 = vsub.f32 0.0, %v685
        %v702 = vsub.f32 0.0, %v686
        %v703 = vsub.f32 0.0, %v687
        %v704 = vsub.f32 0.0, %v688
        %vm705 = vcmp.ne.f32.partialorder %v545, -1.0
        %vm706 = vcmp.ne.f32.partialorder %v546, -1.0
        %vm707 = vcmp.ne.f32.partialorder %v547, -1.0
        %vm708 = vcmp.ne.f32.partialorder %v548, -1.0
        %vm709 = vcmp.ne.f32.partialorder %v549, -1.0
        %vm710 = vcmp.ne.f32.partialorder %v550, -1.0
        %vm711 = vcmp.ne.f32.partialorder %v551, -1.0
        %vm712 = vcmp.ne.f32.partialorder %v552, -1.0
        %vm713 = vcmp.ne.f32.partialorder %v553, -1.0
        %vm714 = vcmp.ne.f32.partialorder %v554, -1.0
        %vm715 = vcmp.ne.f32.partialorder %v555, -1.0
        %vm716 = vcmp.ne.f32.partialorder %v556, -1.0
        %vm717 = vcmp.ne.f32.partialorder %v557, -1.0
        %vm718 = vcmp.ne.f32.partialorder %v558, -1.0
        %vm719 = vcmp.ne.f32.partialorder %v559, -1.0
        %vm720 = vcmp.ne.f32.partialorder %v560, -1.0
        %v721 = vsel %vm705, 1, 0
        %v722 = vsel %vm706, 1, 0
        %v723 = vsel %vm707, 1, 0
        %v724 = vsel %vm708, 1, 0
        %v725 = vsel %vm709, 1, 0
        %v726 = vsel %vm710, 1, 0
        %v727 = vsel %vm711, 1, 0
        %v728 = vsel %vm712, 1, 0
        %v729 = vsel %vm713, 1, 0
        %v730 = vsel %vm714, 1, 0
        %v731 = vsel %vm715, 1, 0
        %v732 = vsel %vm716, 1, 0
        %v733 = vsel %vm717, 1, 0
        %v734 = vsel %vm718, 1, 0
        %v735 = vsel %vm719, 1, 0
        %v736 = vsel %vm720, 1, 0
        %v737 = vcvt.s32.f32 %v721
        %v738 = vcvt.s32.f32 %v722
        %v739 = vcvt.s32.f32 %v723
        %v740 = vcvt.s32.f32 %v724
        %v741 = vcvt.s32.f32 %v725
        %v742 = vcvt.s32.f32 %v726
        %v743 = vcvt.s32.f32 %v727
        %v744 = vcvt.s32.f32 %v728
        %v745 = vcvt.s32.f32 %v729
        %v746 = vcvt.s32.f32 %v730
        %v747 = vcvt.s32.f32 %v731
        %v748 = vcvt.s32.f32 %v732
        %v749 = vcvt.s32.f32 %v733
        %v750 = vcvt.s32.f32 %v734
        %v751 = vcvt.s32.f32 %v735
        %v752 = vcvt.s32.f32 %v736
        %v753 = vmul.f32 %v609, %v737
        %v754 = vmul.f32 %v610, %v738
        %v755 = vmul.f32 %v611, %v739
        %v756 = vmul.f32 %v612, %v740
        %v757 = vmul.f32 %v613, %v741
        %v758 = vmul.f32 %v614, %v742
        %v759 = vmul.f32 %v615, %v743
        %v760 = vmul.f32 %v616, %v744
        %v761 = vmul.f32 %v617, %v745
        %v762 = vmul.f32 %v618, %v746
        %v763 = vmul.f32 %v619, %v747
        %v764 = vmul.f32 %v620, %v748
        %v765 = vmul.f32 %v621, %v749
        %v766 = vmul.f32 %v622, %v750
        %v767 = vmul.f32 %v623, %v751
        %v768 = vmul.f32 %v624, %v752
        %v769 = vmul.f32 %v625, %v625
        %v770 = vmul.f32 %v626, %v626
        %v771 = vmul.f32 %v627, %v627
        %v772 = vmul.f32 %v628, %v628
        %v773 = vmul.f32 %v629, %v629
        %v774 = vmul.f32 %v630, %v630
        %v775 = vmul.f32 %v631, %v631
        %v776 = vmul.f32 %v632, %v632
        %v777 = vmul.f32 %v633, %v633
        %v778 = vmul.f32 %v634, %v634
        %v779 = vmul.f32 %v635, %v635
        %v780 = vmul.f32 %v636, %v636
        %v781 = vmul.f32 %v637, %v637
        %v782 = vmul.f32 %v638, %v638
        %v783 = vmul.f32 %v639, %v639
        %v784 = vmul.f32 %v640, %v640
        %v785 = vmul.f32 %v753, %v769
        %v786 = vmul.f32 %v754, %v770
        %v787 = vmul.f32 %v755, %v771
        %v788 = vmul.f32 %v756, %v772
        %v789 = vmul.f32 %v757, %v773
        %v790 = vmul.f32 %v758, %v774
        %v791 = vmul.f32 %v759, %v775
        %v792 = vmul.f32 %v760, %v776
        %v793 = vmul.f32 %v761, %v777
        %v794 = vmul.f32 %v762, %v778
        %v795 = vmul.f32 %v763, %v779
        %v796 = vmul.f32 %v764, %v780
        %v797 = vmul.f32 %v765, %v781
        %v798 = vmul.f32 %v766, %v782
        %v799 = vmul.f32 %v767, %v783
        %v800 = vmul.f32 %v768, %v784
        %v801 = vmul.f32 %v785, %v689
        %v802 = vmul.f32 %v786, %v690
        %v803 = vmul.f32 %v787, %v691
        %v804 = vmul.f32 %v788, %v692
        %v805 = vmul.f32 %v789, %v693
        %v806 = vmul.f32 %v790, %v694
        %v807 = vmul.f32 %v791, %v695
        %v808 = vmul.f32 %v792, %v696
        %v809 = vmul.f32 %v793, %v697
        %v810 = vmul.f32 %v794, %v698
        %v811 = vmul.f32 %v795, %v699
        %v812 = vmul.f32 %v796, %v700
        %v813 = vmul.f32 %v797, %v701
        %v814 = vmul.f32 %v798, %v702
        %v815 = vmul.f32 %v799, %v703
        %v816 = vmul.f32 %v800, %v704
        %v817 = vadd.f32 %v801, %v802
        %v818 = vadd.f32 %v817, %v803
        %v819 = vadd.f32 %v818, %v804
        %v820 = vadd.f32 %v819, %v805
        %v821 = vadd.f32 %v820, %v806
        %v822 = vadd.f32 %v821, %v807
        %v823 = vadd.f32 %v822, %v808
        %v824 = vadd.f32 %v823, %v809
        %v825 = vadd.f32 %v824, %v810
        %v826 = vadd.f32 %v825, %v811
        %v827 = vadd.f32 %v826, %v812
        %v828 = vadd.f32 %v827, %v813
        %v829 = vadd.f32 %v828, %v814
        %v830 = vadd.f32 %v829, %v815
        %v831 = vadd.f32 %v830, %v816
        %v832 = vld [vmem:[%s481] sm:$0xff]
        %v833 = vadd.f32 %v832, %v831
        %834 = vst [vmem:[%s481] sm:$0xff] %v833
        %v835 = vld [vmem:[%s417] sm:$0xff]
        %v836 = vld [vmem:[%s417 + $0x8] sm:$0xff]
        %v837 = vld [vmem:[%s417 + $0x10] sm:$0xff]
        %v838 = vld [vmem:[%s417 + $0x18] sm:$0xff]
        %v839 = vld [vmem:[%s417 + $0x20] sm:$0xff]
        %v840 = vld [vmem:[%s417 + $0x28] sm:$0xff]
        %v841 = vld [vmem:[%s417 + $0x30] sm:$0xff]
        %v842 = vld [vmem:[%s417 + $0x38] sm:$0xff]
        %v843 = vld [vmem:[%s426] sm:$0xff]
        %v844 = vld [vmem:[%s426 + $0x8] sm:$0xff]
        %v845 = vld [vmem:[%s426 + $0x10] sm:$0xff]
        %v846 = vld [vmem:[%s426 + $0x18] sm:$0xff]
        %v847 = vld [vmem:[%s426 + $0x20] sm:$0xff]
        %v848 = vld [vmem:[%s426 + $0x28] sm:$0xff]
        %v849 = vld [vmem:[%s426 + $0x30] sm:$0xff]
        %v850 = vld [vmem:[%s426 + $0x38] sm:$0xff]
        %v851 = vld [vmem:[%s435] sm:$0xf]
        %v852 = vld [vmem:[%s435 + $0x4] sm:$0xf]
        %v853 = vld [vmem:[%s435 + $0x8] sm:$0xf]
        %v854 = vld [vmem:[%s435 + $0xc] sm:$0xf]
        %v855 = vld [vmem:[%s435 + $0x10] sm:$0xf]
        %v856 = vld [vmem:[%s435 + $0x14] sm:$0xf]
        %v857 = vld [vmem:[%s435 + $0x18] sm:$0xf]
        %v858 = vld [vmem:[%s435 + $0x1c] sm:$0xf]
        %v859 = vunpack.c.l.bf16 %v851
        %v860 = vunpack.c.l.bf16 %v852
        %v861 = vunpack.c.l.bf16 %v853
        %v862 = vunpack.c.l.bf16 %v854
        %v863 = vunpack.c.l.bf16 %v855
        %v864 = vunpack.c.l.bf16 %v856
        %v865 = vunpack.c.l.bf16 %v857
        %v866 = vunpack.c.l.bf16 %v858
        %v867 = vsub.f32 %v835, %v843
        %v868 = vsub.f32 %v836, %v844
        %v869 = vsub.f32 %v837, %v845
        %v870 = vsub.f32 %v838, %v846
        %v871 = vsub.f32 %v839, %v847
        %v872 = vsub.f32 %v840, %v848
        %v873 = vsub.f32 %v841, %v849
        %v874 = vsub.f32 %v842, %v850
        %v875 = vand.u32 2147483647, %v867
        %v876 = vand.u32 2147483647, %v868
        %v877 = vand.u32 2147483647, %v869
        %v878 = vand.u32 2147483647, %v870
        %v879 = vand.u32 2147483647, %v871
        %v880 = vand.u32 2147483647, %v872
        %v881 = vand.u32 2147483647, %v873
        %v882 = vand.u32 2147483647, %v874
        %vm883 = vcmp.ge.f32.partialorder %v875, 0.11111111
        %vm884 = vcmp.ge.f32.partialorder %v876, 0.11111111
        %vm885 = vcmp.ge.f32.partialorder %v877, 0.11111111
        %vm886 = vcmp.ge.f32.partialorder %v878, 0.11111111
        %vm887 = vcmp.ge.f32.partialorder %v879, 0.11111111
        %vm888 = vcmp.ge.f32.partialorder %v880, 0.11111111
        %vm889 = vcmp.ge.f32.partialorder %v881, 0.11111111
        %vm890 = vcmp.ge.f32.partialorder %v882, 0.11111111
        %v891 = vsub.f32 %v875, 0.055555556
        %v892 = vsub.f32 %v876, 0.055555556
        %v893 = vsub.f32 %v877, 0.055555556
        %v894 = vsub.f32 %v878, 0.055555556
        %v895 = vsub.f32 %v879, 0.055555556
        %v896 = vsub.f32 %v880, 0.055555556
        %v897 = vsub.f32 %v881, 0.055555556
        %v898 = vsub.f32 %v882, 0.055555556
        %v899 = vmul.f32 %v875, %v875
        %v900 = vmul.f32 %v876, %v876
        %v901 = vmul.f32 %v877, %v877
        %v902 = vmul.f32 %v878, %v878
        %v903 = vmul.f32 %v879, %v879
        %v904 = vmul.f32 %v880, %v880
        %v905 = vmul.f32 %v881, %v881
        %v906 = vmul.f32 %v882, %v882
        %v907 = vmul.f32 %v899, 4.5
        %v908 = vmul.f32 %v900, 4.5
        %v909 = vmul.f32 %v901, 4.5
        %v910 = vmul.f32 %v902, 4.5
        %v911 = vmul.f32 %v903, 4.5
        %v912 = vmul.f32 %v904, 4.5
        %v913 = vmul.f32 %v905, 4.5
        %v914 = vmul.f32 %v906, 4.5
        %v915 = vsel %vm883, %v891, %v907
        %v916 = vsel %vm884, %v892, %v908
        %v917 = vsel %vm885, %v893, %v909
        %v918 = vsel %vm886, %v894, %v910
        %v919 = vsel %vm887, %v895, %v911
        %v920 = vsel %vm888, %v896, %v912
        %v921 = vsel %vm889, %v897, %v913
        %v922 = vsel %vm890, %v898, %v914
        %v923 = vmul.f32 %v915, %v859
        %v924 = vmul.f32 %v916, %v860
        %v925 = vmul.f32 %v917, %v861
        %v926 = vmul.f32 %v918, %v862
        %v927 = vmul.f32 %v919, %v863
        %v928 = vmul.f32 %v920, %v864
        %v929 = vmul.f32 %v921, %v865
        %v930 = vmul.f32 %v922, %v866
        %v931 = vadd.f32 %v923, %v924
        %v932 = vadd.f32 %v931, %v925
        %v933 = vadd.f32 %v932, %v926
        %v934 = vadd.f32 %v933, %v927
        %v935 = vadd.f32 %v934, %v928
        %v936 = vadd.f32 %v935, %v929
        %v937 = vadd.f32 %v936, %v930
        %v938 = vld [vmem:[%s488] sm:$0xff]
        %v939 = vadd.f32 %v938, %v937
        %940 = vst [vmem:[%s488] sm:$0xff] %v939
        %v941 = vadd.f32 %v859, %v860
        %v942 = vadd.f32 %v941, %v861
        %v943 = vadd.f32 %v942, %v862
        %v944 = vadd.f32 %v943, %v863
        %v945 = vadd.f32 %v944, %v864
        %v946 = vadd.f32 %v945, %v865
        %v947 = vadd.f32 %v946, %v866
        %v948 = vld [vmem:[%s495] sm:$0xff]
        %v949 = vadd.f32 %v948, %v947
        %950 = vst [vmem:[%s495] sm:$0xff] %v949
        %s951 = sand.u32 %s194, 1
        %s952 = scalar_lea.sflag [#allocation4], %s951
        %s953 = sand.u32 %s194, 1
        %s954 = smul.addr %s953, 8
        %s955 = scalar_lea.vmem [#allocation11], %s954
        %s956 = sand.u32 %s34, 1
        %s957 = scalar_lea.sflag [#allocation13], %s956
        %s958 = sand.u32 %s220, 1
        %s959 = smul.addr %s958, 8
        %s960 = scalar_lea.vmem [#allocation12], %s959
        %s961 = sand.u32 %s34, 1
        %s962 = scalar_lea.sflag [#allocation13], %s961
        %s963 = sand.u32 %s246, 1
        %s964 = smul.addr %s963, 8
        %s965 = scalar_lea.vmem [#allocation14], %s964
        // Predicated region
        $region65: #{tpu_custom_call.1} parent=39 // pred_check
          %p966 = pneg %p204
        $region66: #{tpu_custom_call.1} parent=39 // pred_check_branch
          %968 = sbr.rel (%p966) target = $region68
        $region67: #{tpu_custom_call.1} parent=39 // pred_region
          %s970 = ssub.s32 128, 128
          %971 = vsyncadd %s952, %s970
          %s972 = smul.addr %s38, 128
          %s973 = scalar_lea.hbm %s5, %s972
          %s975 = sshll.u32 %s955, 4
          %s976 = int_to_ptr.vmem [resolvable:$true] %s975
          %978 = dma.vmem_to_hbm [thread:$0]  %s976, 128, %s973, %s952
        $region68: #{tpu_custom_call.1} parent=39 // pred_fallthru
          _
        // Predicated region
        $region69: #{tpu_custom_call.1} parent=39 // pred_check
          %p979 = pneg %p230
        $region70: #{tpu_custom_call.1} parent=39 // pred_check_branch
          %981 = sbr.rel (%p979) target = $region72
        $region71: #{tpu_custom_call.1} parent=39 // pred_region
          %s983 = ssub.s32 128, 128
          %984 = vsyncadd %s957, %s983
          %s985 = smul.addr %s38, 128
          %s986 = scalar_lea.hbm %s6, %s985
          %s988 = sshll.u32 %s960, 4
          %s989 = int_to_ptr.vmem [resolvable:$true] %s988
          %991 = dma.vmem_to_hbm [thread:$0]  %s989, 128, %s986, %s957
        $region72: #{tpu_custom_call.1} parent=39 // pred_fallthru
          _
        // Predicated region
        $region73: #{tpu_custom_call.1} parent=39 // pred_check
          %p992 = pneg %p256
        $region74: #{tpu_custom_call.1} parent=39 // pred_check_branch
          %994 = sbr.rel (%p992) target = $region76
        $region75: #{tpu_custom_call.1} parent=39 // pred_region
          %s996 = ssub.s32 128, 128
          %997 = vsyncadd %s962, %s996
          %s998 = smul.addr %s38, 128
          %s999 = scalar_lea.hbm %s7, %s998
          %s1001 = sshll.u32 %s965, 4
          %s1002 = int_to_ptr.vmem [resolvable:$true] %s1001
          %1004 = dma.vmem_to_hbm [thread:$0]  %s1002, 128, %s999, %s962
        $region76: #{tpu_custom_call.1} parent=39 // pred_fallthru
          _
      $region40: #{tpu_custom_call.1} parent=5 // pred_fallthru
        _
      %p1005 = scmp.le.s32.totalorder 2, %s29
      // Predicated region
      $region77: #{tpu_custom_call.1} parent=5 // pred_check
        %p1006 = pneg %p1005
      $region78: #{tpu_custom_call.1} parent=5 // pred_check_branch
        %1008 = sbr.rel (%p1006) target = $region80
      $region79: #{tpu_custom_call.1} parent=5 // pred_region
        %s1009 = ssub.s32 %s29, 2
        // Predicated region
        $region81: #{tpu_custom_call.1} parent=79 // pred_check
          %p1010 = pneg %p210
        $region82: #{tpu_custom_call.1} parent=79 // pred_check_branch
          %1012 = sbr.rel (%p1010) target = $region84
        $region83: #{tpu_custom_call.1} parent=79 // pred_region
          %s1013 = sand.u32 %s195, 1
          %s1014 = scalar_lea.sflag [#allocation4], %s1013
          %s1015 = sand.u32 %s195, 1
          %s1016 = smul.addr %s1015, 8
          %s1017 = scalar_lea.vmem [#allocation11], %s1016
          %1018 = dma.done %s1014, 128
        $region84: #{tpu_custom_call.1} parent=79 // pred_fallthru
          _
        // Predicated region
        $region85: #{tpu_custom_call.1} parent=79 // pred_check
          %p1019 = pneg %p236
        $region86: #{tpu_custom_call.1} parent=79 // pred_check_branch
          %1021 = sbr.rel (%p1019) target = $region88
        $region87: #{tpu_custom_call.1} parent=79 // pred_region
          %s1022 = sand.u32 %s35, 1
          %s1023 = scalar_lea.sflag [#allocation13], %s1022
          %s1024 = sand.u32 %s221, 1
          %s1025 = smul.addr %s1024, 8
          %s1026 = scalar_lea.vmem [#allocation12], %s1025
          %1027 = dma.done %s1023, 128
        $region88: #{tpu_custom_call.1} parent=79 // pred_fallthru
          _
        // Predicated region
        $region89: #{tpu_custom_call.1} parent=79 // pred_check
          %p1028 = pneg %p262
        $region90: #{tpu_custom_call.1} parent=79 // pred_check_branch
          %1030 = sbr.rel (%p1028) target = $region92
        $region91: #{tpu_custom_call.1} parent=79 // pred_region
          %s1031 = sand.u32 %s35, 1
          %s1032 = scalar_lea.sflag [#allocation13], %s1031
          %s1033 = sand.u32 %s247, 1
          %s1034 = smul.addr %s1033, 8
          %s1035 = scalar_lea.vmem [#allocation14], %s1034
          %1036 = dma.done %s1032, 128
        $region92: #{tpu_custom_call.1} parent=79 // pred_fallthru
          _
      $region80: #{tpu_custom_call.1} parent=5 // pred_fallthru
        _
    $region6: #{tpu_custom_call.1} parent=1 // loop_footer
      %s33 = sadd.s32 1, %s29
    $region7: #{tpu_custom_call.1} parent=1 // loop_footer_branch
      %28 = sbr.rel target = $region3
    $region8: #{tpu_custom_call.1} parent=1 // loop_exit
      _
    %1037 = vsyncpa [#allocation3], 1
    %s1038 = scalar_lea.sflag [#allocation3], 1
    %1039 = vsyncpa %s1038, 1
    %1040 = vsyncpa [#allocation6], 1
    %s1041 = scalar_lea.sflag [#allocation6], 1
    %1042 = vsyncpa %s1041, 1
    %1043 = vsyncpa [#allocation9], 1
    %s1044 = scalar_lea.sflag [#allocation9], 1
    %1045 = vsyncpa %s1044, 1
    %1046 = vsyncpa [#allocation4], 1
    %s1047 = scalar_lea.sflag [#allocation4], 1
    %1048 = vsyncpa %s1047, 1
    %1049 = vsyncpa [#allocation13], 1
    %s1050 = scalar_lea.sflag [#allocation13], 1
    %1051 = vsyncpa %s1050, 1

</llo_original>
